<compile_context>
chip_gen: v7x
topology: tpu7x:2x2x1
jax: 0.10.0
libtpu: 0.0.40
codegen_flags: <defaults>
</compile_context>

<pallas_src>
import jax
import jax.numpy as jnp
from jax import lax
from jax.experimental import pallas as pl
from jax.experimental.pallas import tpu as pltpu


# ------------------------------- kernel body --------------------------------

def _make_conv_bn_act_kernel(W, C_in, C_lane, k, TH):
    """Kernel for one (image, row-chunk) grid step."""

    def kernel(x_ref, w_ref, s_ref, b_ref, o_ref):
        # x_ref : (H+2p, W+2p, C_in)   bf16  pre-padded image (resident per n)
        # w_ref : (k*k, C_in, C_lane)  bf16  raw conv weights (tap-major)
        # s_ref : (1, C_lane)          f32   BN scale  = gamma / sqrt(var+eps)
        # b_ref : (1, C_lane)          f32   BN shift  = (b - mean)*scale + beta
        # o_ref : (TH*W, C_lane)       f32   output slab for this row chunk
        r0 = pl.program_id(1) * TH
        if TH % 8 == 0:
            r0 = pl.multiple_of(r0, 8)

        acc = jnp.zeros((TH * W, C_lane), jnp.float32)
        # k*k accumulating MXU matmuls over contiguous slabs of the padded
        # image: no im2col packing, no padded-image scratch copy.
        for dy in range(k):
            for dx in range(k):
                slab = x_ref[pl.ds(r0 + dy, TH), dx:dx + W, :]
                acc = acc + jnp.dot(slab.reshape(TH * W, C_in),
                                    w_ref[dy * k + dx],
                                    preferred_element_type=jnp.float32)

        y = acc * s_ref[...] + b_ref[...]     # folded BN, applied in f32
        o_ref[...] = y * jax.nn.sigmoid(y)    # SiLU (EUP), stored as f32

    return kernel


# --------------------------------- helpers ----------------------------------

def _round_up(x, m):
    return (x + m - 1) // m * m


def _pick_row_tile(H, W, C_lane, max_block_bytes=2 << 20):
    """Largest TH with TH | H, (TH*W) sublane-aligned (mult of 8, or TH == H)
    and an f32 output block of TH*W*C_lane*4 <= max_block_bytes."""
    row_bytes = W * C_lane * 4
    cands = [t for t in range(1, H + 1)
             if H % t == 0 and ((t * W) % 8 == 0 or t == H)]
    fitting = [t for t in cands if t * row_bytes <= max_block_bytes]
    if fitting:
        return max(fitting)
    return min(cands)


def _vmem_limit_bytes(x_blk, o_blk, w_bytes, work_bytes):
    # Double-buffered input/output blocks + weights + in-kernel working set,
    # with headroom; capped by the actual chip's VMEM (v7x: 64 MiB physical).
    need = 2 * (x_blk + o_blk) + w_bytes + work_bytes + (2 << 20)
    try:
        cap = pltpu.get_tpu_info().vmem_capacity_bytes
        cap = min(cap - (8 << 20), 100 << 20)
    except Exception:  # fallback that is safe on every generation
        cap = 48 << 20
    return int(min(max(2 * need, 32 << 20), cap))


# --------------------------------- wrapper ----------------------------------

def conv_bn_act_pallas(x_nhwc, params, *, kernel_size, stride=1, groups=1,
                       row_tile=None):
    """Fused Conv2d(k, same pad) + BatchNorm2d(eval) + SiLU.

    x_nhwc: (N, H, W, C_in) f32.  params: dict with HWIO conv weight + bias
    and BN running stats.  Returns (N, H, W, C_out) f32.
    """
    # TODO(synk): stride > 1 and grouped conv (groups > 1) are not implemented.
    assert stride == 1 and groups == 1 and kernel_size % 2 == 1, (
        "kernel supports stride=1, groups=1, odd kernel_size")
    N, H, W, C_in = x_nhwc.shape
    k = kernel_size
    p = (k - 1) // 2
    C_out = params["w"].shape[-1]

    # Lane-pad C_out to a multiple of 128 (unmasked full-width stores, better
    # MXU N-fill) whenever the byte inflation is <= 2x.
    C_lane = _round_up(C_out, 128)
    if C_lane > 2 * C_out:
        C_lane = C_out
    pad_c = C_lane - C_out

    TH = row_tile if row_tile is not None else _pick_row_tile(H, W, C_lane)
    assert H % TH == 0 and ((TH * W) % 8 == 0 or TH == H), (H, W, TH)
    n_chunks = H // TH

    # BN folded into f32 per-channel scale/shift (applied post-matmul in f32).
    scale = params["gamma"] / jnp.sqrt(params["var"] + params["eps"])
    shift = (params["b"] - params["mean"]) * scale + params["beta"]
    w_k = params["w"].reshape(k * k, C_in, C_out)
    if pad_c:
        w_k = jnp.pad(w_k, ((0, 0), (0, 0), (0, pad_c)))
        scale = jnp.pad(scale, (0, pad_c))
        shift = jnp.pad(shift, (0, pad_c))
    w_k = w_k.astype(jnp.bfloat16)
    s_k = scale.reshape(1, C_lane).astype(jnp.float32)
    b_k = shift.reshape(1, C_lane).astype(jnp.float32)

    # Spatial zero-pad ONCE in HBM (cheap DMA fringe) instead of in-kernel.
    x_pad = jnp.pad(x_nhwc.astype(jnp.bfloat16),
                    ((0, 0), (p, p), (p, p), (0, 0)))
    Hp, Wp = H + 2 * p, W + 2 * p

    kernel = _make_conv_bn_act_kernel(W, C_in, C_lane, k, TH)

    x_blk = Hp * Wp * C_in * 2                     # bf16 image block
    o_blk = TH * W * C_lane * 4                    # f32 output slab
    w_bytes = k * k * C_in * C_lane * 2 + 2 * C_lane * 4
    work = TH * W * (2 * C_lane * 4 + 2 * C_in * 2)  # acc/y + slab temporaries
    vmem_limit = _vmem_limit_bytes(x_blk, o_blk, w_bytes, work)

    cost = pl.CostEstimate(
        flops=2 * N * H * W * k * k * C_in * C_out,
        transcendentals=N * H * W * C_out,
        bytes_accessed=(N * Hp * Wp * C_in * 2 + w_bytes
                        + N * H * W * C_lane * 4),
    )

    out = pl.pallas_call(
        kernel,
        out_shape=jax.ShapeDtypeStruct((N, H * W, C_lane), jnp.float32),
        grid=(N, n_chunks),
        in_specs=[
            # Full padded image resident per n (index invariant in chunk axis).
            pl.BlockSpec((None, Hp, Wp, C_in), lambda n, c: (n, 0, 0, 0)),
            pl.BlockSpec((k * k, C_in, C_lane), lambda n, c: (0, 0, 0)),
            pl.BlockSpec((1, C_lane), lambda n, c: (0, 0)),
            pl.BlockSpec((1, C_lane), lambda n, c: (0, 0)),
        ],
        # Row-tiled, lane-dense output slab.
        out_specs=pl.BlockSpec((None, TH * W, C_lane), lambda n, c: (n, c, 0)),
        compiler_params=pltpu.CompilerParams(
            dimension_semantics=("parallel", "parallel"),
            vmem_limit_bytes=vmem_limit),
        cost_estimate=cost,
    )(x_pad, w_k, s_k, b_k)

    if pad_c:
        out = out[:, :, :C_out]
    return out.reshape(N, H, W, C_out)


# ------------------------ parameter setup / reference -----------------------

def init_conv_bn_params(key, c_in, c_out, k):
    ks = jax.random.split(key, 6)
    return dict(
        w=jax.random.normal(ks[0], (k, k, c_in, c_out), jnp.float32) * 0.1,  # HWIO
        b=jax.random.normal(ks[1], (c_out,), jnp.float32) * 0.1,
        gamma=1.0 + 0.1 * jax.random.normal(ks[2], (c_out,), jnp.float32),
        beta=0.1 * jax.random.normal(ks[3], (c_out,), jnp.float32),
        mean=0.1 * jax.random.normal(ks[4], (c_out,), jnp.float32),
        var=jax.random.uniform(ks[5], (c_out,), jnp.float32, 0.5, 1.5),
        eps=1e-5,
    )


def reference_conv_bn_act(x_nhwc, params, k):
    p = (k - 1) // 2
    y = lax.conv_general_dilated(
        x_nhwc, params["w"], window_strides=(1, 1),
        padding=[(p, p), (p, p)],
        dimension_numbers=("NHWC", "HWIO", "NHWC"))
    y = y + params["b"]
    y = ((y - params["mean"]) / jnp.sqrt(params["var"] + params["eps"])
         * params["gamma"] + params["beta"])
    return y * jax.nn.sigmoid(y)   # SiLU


# ----------------------------------- test ------------------------------------

if __name__ == "__main__":
    N, C_in, H, W = 2, 8, 16, 16

    key = jax.random.PRNGKey(0)
    kx, kp1, kp2, kp3 = jax.random.split(key, 4)
    x_nchw = jax.random.normal(kx, (N, C_in, H, W), jnp.float32)  # PyTorch layout
    x_nhwc = jnp.transpose(x_nchw, (0, 2, 3, 1))                  # kernel layout

    cases = [
        # (kernel_size, C_out, row_tile, key)
        (1, 8, None, kp1),   # 1x1 conv (module default), natural C_out path
        (3, 8, None, kp2),   # 3x3 same-pad conv
        (3, 64, None, kp3),  # 3x3 conv, lane-padded C_out path (64 -> 128)
        (3, 8, 8, kp2),      # 3x3 conv, multiple row chunks in the grid
    ]
    for ksz, c_out, row_tile, kp in cases:
        params = init_conv_bn_params(kp, C_in, c_out, ksz)
        out = jax.block_until_ready(
            conv_bn_act_pallas(x_nhwc, params, kernel_size=ksz,
                               row_tile=row_tile))
        ref = jax.block_until_ready(reference_conv_bn_act(x_nhwc, params, ksz))
        assert out.shape == (N, H, W, c_out), out.shape
        err = float(jnp.max(jnp.abs(out - ref)))
        # bf16 MXU operands (f32 accumulate, f32 BN) vs f32 reference.
        assert jnp.allclose(out, ref, rtol=3e-2, atol=3e-2), (
            ksz, c_out, row_tile, err)

    print("KERNEL_OK")
</pallas_src>

<mosaic_0001>
module attributes {stable_mosaic.version = 11 : i64} {
  func.func @kernel(%arg0: i32, %arg1: i32, %arg2: memref<1x16x16x8xbf16, #tpu.memory_space<vmem>>, %arg3: memref<1x8x8xbf16, #tpu.memory_space<vmem>>, %arg4: memref<1x8xf32, #tpu.memory_space<vmem>>, %arg5: memref<1x8xf32, #tpu.memory_space<vmem>>, %arg6: memref<1x256x8xf32, #tpu.memory_space<vmem>>) attributes {dimension_semantics = [#tpu.dimension_semantics<parallel>, #tpu.dimension_semantics<parallel>], iteration_bounds = array<i64: 2, 1>, scalar_prefetch = 0 : i64, scratch_operands = 0 : i64, tpu.core_type = #tpu.core_type<tc>, window_params = [{transform_indices = @transform_0, window_bounds = array<i64: 1, 16, 16, 8>}, {pipeline_mode = #tpu.pipeline_mode<synchronous>, transform_indices = @transform_1, window_bounds = array<i64: 1, 8, 8>}, {pipeline_mode = #tpu.pipeline_mode<synchronous>, transform_indices = @transform_2, window_bounds = array<i64: 1, 8>}, {pipeline_mode = #tpu.pipeline_mode<synchronous>, transform_indices = @transform_3, window_bounds = array<i64: 1, 8>}, {transform_indices = @transform_4, window_bounds = array<i64: 1, 256, 8>}]} {
    %c16_i32 = arith.constant 16 : i32
    %0 = arith.muli %arg1, %c16_i32 : i32
    %1 = tpu.assume_multiple %0, 8 : i32
    %cst = arith.constant 0.000000e+00 : f32
    %2 = vector.broadcast %cst : f32 to vector<256x8xf32>
    %c0_i32 = arith.constant 0 : i32
    %3 = arith.addi %1, %c0_i32 : i32
    %c0 = arith.constant 0 : index
    %4 = arith.index_cast %3 : i32 to index
    %c0_0 = arith.constant 0 : index
    %c0_1 = arith.constant 0 : index
    %5 = vector.load %arg2[%c0, %4, %c0_0, %c0_1] : memref<1x16x16x8xbf16, #tpu.memory_space<vmem>>, vector<1x16x16x8xbf16>
    %6 = vector.shape_cast %5 : vector<1x16x16x8xbf16> to vector<16x16x8xbf16>
    %7 = vector.shape_cast %6 : vector<16x16x8xbf16> to vector<256x8xbf16>
    %c0_2 = arith.constant 0 : index
    %c0_3 = arith.constant 0 : index
    %c0_4 = arith.constant 0 : index
    %8 = vector.load %arg3[%c0_2, %c0_3, %c0_4] : memref<1x8x8xbf16, #tpu.memory_space<vmem>>, vector<1x8x8xbf16>
    %9 = vector.shape_cast %8 : vector<1x8x8xbf16> to vector<8x8xbf16>
    %cst_5 = arith.constant dense<0.000000e+00> : vector<256x8xf32>
    %10 = tpu.matmul %7, %9, %cst_5 {dimension_numbers = #tpu.dot_dimension_numbers<[1], [0], [0], [1], [0, 0, 1, 1], [], []>} : vector<256x8xbf16>, vector<8x8xbf16>, vector<256x8xf32> -> vector<256x8xf32>
    %11 = arith.addf %2, %10 : vector<256x8xf32>
    %c0_6 = arith.constant 0 : index
    %c0_7 = arith.constant 0 : index
    %12 = vector.load %arg4[%c0_6, %c0_7] : memref<1x8xf32, #tpu.memory_space<vmem>>, vector<1x8xf32>
    %13 = vector.broadcast %12 : vector<1x8xf32> to vector<256x8xf32>
    %14 = arith.mulf %11, %13 : vector<256x8xf32>
    %c0_8 = arith.constant 0 : index
    %c0_9 = arith.constant 0 : index
    %15 = vector.load %arg5[%c0_8, %c0_9] : memref<1x8xf32, #tpu.memory_space<vmem>>, vector<1x8xf32>
    %16 = vector.broadcast %15 : vector<1x8xf32> to vector<256x8xf32>
    %17 = arith.addf %14, %16 : vector<256x8xf32>
    %18 = arith.negf %17 : vector<256x8xf32>
    %19 = math.exp %18 : vector<256x8xf32>
    %cst_10 = arith.constant 1.000000e+00 : f32
    %20 = vector.broadcast %cst_10 : f32 to vector<256x8xf32>
    %21 = arith.addf %20, %19 : vector<256x8xf32>
    %22 = arith.divf %20, %21 : vector<256x8xf32>
    %23 = arith.mulf %17, %22 : vector<256x8xf32>
    %c0_11 = arith.constant 0 : index
    %c0_12 = arith.constant 0 : index
    %c0_13 = arith.constant 0 : index
    %24 = vector.load %arg6[%c0_11, %c0_12, %c0_13] : memref<1x256x8xf32, #tpu.memory_space<vmem>>, vector<1x256x8xf32>
    %25 = vector.shape_cast %24 : vector<1x256x8xf32> to vector<256x8xf32>
    %26 = vector.shape_cast %23 : vector<256x8xf32> to vector<1x256x8xf32>
    tpu.vector_store %arg6[%c0_11, %c0_12, %c0_13], %26 {strides = array<i32>} : memref<1x256x8xf32, #tpu.memory_space<vmem>>, vector<1x256x8xf32>,
    return
  }
  func.func @transform_0(%arg0: i32, %arg1: i32) -> (i32, i32, i32, i32) {
    %c0_i32 = arith.constant 0 : i32
    %c0_i32_0 = arith.constant 0 : i32
    %c0_i32_1 = arith.constant 0 : i32
    %c0_i32_2 = arith.constant 0 : i32
    return %arg0, %c0_i32, %c0_i32_0, %c0_i32_1 : i32, i32, i32, i32
  }
  func.func @transform_1(%arg0: i32, %arg1: i32) -> (i32, i32, i32) {
    %c0_i32 = arith.constant 0 : i32
    %c0_i32_0 = arith.constant 0 : i32
    %c0_i32_1 = arith.constant 0 : i32
    %c0_i32_2 = arith.constant 0 : i32
    return %c0_i32, %c0_i32_0, %c0_i32_1 : i32, i32, i32
  }
  func.func @transform_2(%arg0: i32, %arg1: i32) -> (i32, i32) {
    %c0_i32 = arith.constant 0 : i32
    %c0_i32_0 = arith.constant 0 : i32
    %c0_i32_1 = arith.constant 0 : i32
    return %c0_i32, %c0_i32_0 : i32, i32
  }
  func.func @transform_3(%arg0: i32, %arg1: i32) -> (i32, i32) {
    %c0_i32 = arith.constant 0 : i32
    %c0_i32_0 = arith.constant 0 : i32
    %c0_i32_1 = arith.constant 0 : i32
    return %c0_i32, %c0_i32_0 : i32, i32
  }
  func.func @transform_4(%arg0: i32, %arg1: i32) -> (i32, i32, i32) {
    %c0_i32 = arith.constant 0 : i32
    %c0_i32_0 = arith.constant 0 : i32
    return %arg0, %arg1, %c0_i32 : i32, i32, i32
  }
}

</mosaic_0001>

<llo_original>
// kernel: tpu_custom_call.1
$region0: #{tpu_custom_call.1}
  #allocation0 [shape = 'u32[]', space=smem, size = 0x4, offset = 0x4, fixed_abs, tag = 'smem constant byte address 0x4 - core index']
  #allocation1 [shape = 'u32[144,128]{1,0:T(1,128)}', space=vmem, size = 0x12000, scoped, tag = 'internal scratch']
  %s0 = inlined_call_operand.vmem [shape: bf16[2,16,16,8], index: 0, kind: input, shape index: {}]
  %s1 = inlined_call_operand.vmem [shape: bf16[1,8,8], index: 1, kind: input, shape index: {}]
  %s2 = inlined_call_operand.vmem [shape: f32[1,8], index: 2, kind: input, shape index: {}]
  %s3 = inlined_call_operand.vmem [shape: f32[1,8], index: 3, kind: input, shape index: {}]
  %s4 = inlined_call_operand.vmem [shape: f32[2,256,8], index: 4, kind: output, shape index: {}]
  %s5 = sld [smem:[#allocation0]]
  $region49: #{tpu_custom_call.1} parent=0
    _
  %s7 = ssub.s32 1, %s5
  %s8 = scalar_select 0, %s7, %s5
  loop: start=0, step=1, limit=4
  $region2: #{tpu_custom_call.1} parent=0 // loop_pre_header
    _
  $region3: #{tpu_custom_call.1} parent=0 // loop_header
    %s10 = sphi 0, %s14
    %p11 = scmp.ge.s32.totalorder %s10, 4
    %s17 = sphi 0, %s29
    %s18 = sphi 0, %s25
    %s19 = sphi 0, %s17
    %s20 = sphi 0, %s18
    %s21 = sphi 0, %s19
    %s22 = sphi 0, %s20
    %s32 = sphi 0, %s34
    %s35 = sphi 0, %s32
    %s36 = sphi 0, %s35
    %s52 = sphi 0, %s36
    %s56 = sphi 0, %s56
    %s58 = sphi 0, %s56
    %s59 = sphi 0, %s58
    %s73 = sphi 0, %s59
    %s77 = sphi 0, %s77
    %s79 = sphi 0, %s77
    %s80 = sphi 0, %s79
    %s94 = sphi 0, %s80
    %s98 = sphi 0, %s98
    %s100 = sphi 0, %s98
    %s101 = sphi 0, %s100
    %s115 = sphi 0, %s101
    %s123 = sphi 0, %s125
    %s126 = sphi 0, %s123
    %s127 = sphi 0, %s126
    %s143 = sphi 0, %s127
  $region4: #{tpu_custom_call.1} parent=0 // loop_header_branch
    %13 = sbr.rel (%p11) target = $region8
  $region5: #{tpu_custom_call.1} parent=0 // loop_body
    %s15 = ssub.s32 %s10, 1
    %s16 = ssub.s32 %s10, 2
    %s23 = sadd.s32 1, %s18
    %p24 = scmp.ge.s32.totalorder %s23, 1
    %s25 = scalar_select %p24, 0, %s23
    %s26 = sadd.s32 1, %s17
    %s27 = scalar_select %p24, %s26, %s17
    %p28 = scmp.ge.s32.totalorder %s27, 2
    %s29 = scalar_select %p28, 0, %s27
    %s30 = ssub.s32 %s17, %s29
    %p31 = scmp.eq.s32.totalorder %s30, 0
    %s33 = sadd.s32 %s32, 1
    %s34 = scalar_select %p31, %s32, %s33
    %p37 = pneg %p31
    %p38 = scmp.eq.s32.totalorder %s10, 1
    %p39 = por %p37, %p38
    %p40 = scmp.ne.s32.totalorder %s32, %s35
    %p41 = scmp.eq.s32.totalorder %s10, 0
    %p42 = por %p40, %p41
    %p43 = scmp.ne.s32.totalorder %s32, %s35
    %p44 = scmp.eq.s32.totalorder %s15, 1
    %p45 = por %p43, %p44
    %p46 = scmp.ne.s32.totalorder %s35, %s36
    %p47 = scmp.eq.s32.totalorder %s15, 0
    %p48 = por %p46, %p47
    %p49 = scmp.ne.s32.totalorder %s35, %s36
    %p50 = scmp.eq.s32.totalorder %s16, 1
    %p51 = por %p49, %p50
    %p53 = scmp.ne.s32.totalorder %s36, %s52
    %p54 = scmp.eq.s32.totalorder %s16, 0
    %p55 = por %p53, %p54
    %s57 = sadd.s32 %s56, 1
    %p60 = scmp.eq.s32.totalorder %s10, 1
    %p61 = scmp.ne.s32.totalorder %s56, %s58
    %p62 = scmp.eq.s32.totalorder %s10, 0
    %p63 = por %p61, %p62
    %p64 = scmp.ne.s32.totalorder %s56, %s58
    %p65 = scmp.eq.s32.totalorder %s15, 1
    %p66 = por %p64, %p65
    %p67 = scmp.ne.s32.totalorder %s58, %s59
    %p68 = scmp.eq.s32.totalorder %s15, 0
    %p69 = por %p67, %p68
    %p70 = scmp.ne.s32.totalorder %s58, %s59
    %p71 = scmp.eq.s32.totalorder %s16, 1
    %p72 = por %p70, %p71
    %p74 = scmp.ne.s32.totalorder %s59, %s73
    %p75 = scmp.eq.s32.totalorder %s16, 0
    %p76 = por %p74, %p75
    %s78 = sadd.s32 %s77, 1
    %p81 = scmp.eq.s32.totalorder %s10, 1
    %p82 = scmp.ne.s32.totalorder %s77, %s79
    %p83 = scmp.eq.s32.totalorder %s10, 0
    %p84 = por %p82, %p83
    %p85 = scmp.ne.s32.totalorder %s77, %s79
    %p86 = scmp.eq.s32.totalorder %s15, 1
    %p87 = por %p85, %p86
    %p88 = scmp.ne.s32.totalorder %s79, %s80
    %p89 = scmp.eq.s32.totalorder %s15, 0
    %p90 = por %p88, %p89
    %p91 = scmp.ne.s32.totalorder %s79, %s80
    %p92 = scmp.eq.s32.totalorder %s16, 1
    %p93 = por %p91, %p92
    %p95 = scmp.ne.s32.totalorder %s80, %s94
    %p96 = scmp.eq.s32.totalorder %s16, 0
    %p97 = por %p95, %p96
    %s99 = sadd.s32 %s98, 1
    %p102 = scmp.eq.s32.totalorder %s10, 1
    %p103 = scmp.ne.s32.totalorder %s98, %s100
    %p104 = scmp.eq.s32.totalorder %s10, 0
    %p105 = por %p103, %p104
    %p106 = scmp.ne.s32.totalorder %s98, %s100
    %p107 = scmp.eq.s32.totalorder %s15, 1
    %p108 = por %p106, %p107
    %p109 = scmp.ne.s32.totalorder %s100, %s101
    %p110 = scmp.eq.s32.totalorder %s15, 0
    %p111 = por %p109, %p110
    %p112 = scmp.ne.s32.totalorder %s100, %s101
    %p113 = scmp.eq.s32.totalorder %s16, 1
    %p114 = por %p112, %p113
    %p116 = scmp.ne.s32.totalorder %s101, %s115
    %p117 = scmp.eq.s32.totalorder %s16, 0
    %p118 = por %p116, %p117
    %s119 = ssub.s32 %s17, %s29
    %s120 = ssub.s32 %s18, %s25
    %s121 = sor.u32 %s119, %s120
    %p122 = scmp.eq.s32.totalorder %s121, 0
    %s124 = sadd.s32 %s123, 1
    %s125 = scalar_select %p122, %s123, %s124
    %p128 = pneg %p122
    %p129 = scmp.eq.s32.totalorder %s10, 1
    %p130 = por %p128, %p129
    %p131 = scmp.ne.s32.totalorder %s123, %s126
    %p132 = scmp.eq.s32.totalorder %s10, 0
    %p133 = por %p131, %p132
    %p134 = scmp.ne.s32.totalorder %s123, %s126
    %p135 = scmp.eq.s32.totalorder %s15, 1
    %p136 = por %p134, %p135
    %p137 = scmp.ne.s32.totalorder %s126, %s127
    %p138 = scmp.eq.s32.totalorder %s15, 0
    %p139 = por %p137, %p138
    %p140 = scmp.ne.s32.totalorder %s126, %s127
    %p141 = scmp.eq.s32.totalorder %s16, 1
    %p142 = por %p140, %p141
    %p144 = scmp.ne.s32.totalorder %s127, %s143
    %p145 = scmp.eq.s32.totalorder %s16, 0
    %p146 = por %p144, %p145
    %p147 = scmp.le.s32.totalorder 1, %s10
    %p148 = scmp.lt.s32.totalorder %s10, 3
    %p149 = pnand %p147, %p148
    %p150 = pneg %p149
    // Predicated region
    $region9: #{tpu_custom_call.1} parent=5 // pred_check
      _
    $region10: #{tpu_custom_call.1} parent=5 // pred_check_branch
      %152 = sbr.rel (%p149) target = $region12
    $region11: #{tpu_custom_call.1} parent=5 // pred_region
      %s153 = ssub.s32 %s10, 1
      // Predicated region
      $region13: #{tpu_custom_call.1} parent=11 // pred_check
        %p154 = pneg %p69
      $region14: #{tpu_custom_call.1} parent=11 // pred_check_branch
        %156 = sbr.rel (%p154) target = $region16
      $region15: #{tpu_custom_call.1} parent=11 // pred_region
        _
      $region16: #{tpu_custom_call.1} parent=11 // pred_fallthru
        _
      // Predicated region
      $region17: #{tpu_custom_call.1} parent=11 // pred_check
        %p157 = pneg %p90
      $region18: #{tpu_custom_call.1} parent=11 // pred_check_branch
        %159 = sbr.rel (%p157) target = $region20
      $region19: #{tpu_custom_call.1} parent=11 // pred_region
        _
      $region20: #{tpu_custom_call.1} parent=11 // pred_fallthru
        _
      // Predicated region
      $region21: #{tpu_custom_call.1} parent=11 // pred_check
        %p160 = pneg %p111
      $region22: #{tpu_custom_call.1} parent=11 // pred_check_branch
        %162 = sbr.rel (%p160) target = $region24
      $region23: #{tpu_custom_call.1} parent=11 // pred_region
        _
      $region24: #{tpu_custom_call.1} parent=11 // pred_fallthru
        _
    $region12: #{tpu_custom_call.1} parent=5 // pred_fallthru
      _
    %p163 = scmp.lt.s32.totalorder %s10, 2
    // Predicated region
    $region25: #{tpu_custom_call.1} parent=5 // pred_check
      %p164 = pneg %p163
    $region26: #{tpu_custom_call.1} parent=5 // pred_check_branch
      %166 = sbr.rel (%p164) target = $region28
    $region27: #{tpu_custom_call.1} parent=5 // pred_region
      // Predicated region
      $region29: #{tpu_custom_call.1} parent=27 // pred_check
        %p167 = pneg %p42
      $region30: #{tpu_custom_call.1} parent=27 // pred_check_branch
        %169 = sbr.rel (%p167) target = $region32
      $region31: #{tpu_custom_call.1} parent=27 // pred_region
        %p170 = scmp.lt.s32.totalorder %s17, 1
        %s171 = scalar_select %p170, %s17, 1
        %s172 = smul.addr %s171, 32
        %s173 = smul.addr %s172, 4
        %s174 = scalar_lea.vmem %s0, %s173
      $region32: #{tpu_custom_call.1} parent=27 // pred_fallthru
        _
    $region28: #{tpu_custom_call.1} parent=5 // pred_fallthru
      _
    %p175 = scmp.le.s32.totalorder 1, %s10
    %p176 = scmp.lt.s32.totalorder %s10, 3
    %p177 = pnand %p175, %p176
    %p178 = pneg %p177
    // Predicated region
    $region33: #{tpu_custom_call.1} parent=5 // pred_check
      _
    $region34: #{tpu_custom_call.1} parent=5 // pred_check_branch
      %180 = sbr.rel (%p177) target = $region36
    $region35: #{tpu_custom_call.1} parent=5 // pred_region
      %s181 = ssub.s32 %s10, 1
      %p182 = scmp.lt.s32.totalorder %s19, 1
      %s183 = scalar_select %p182, %s19, 1
      %s184 = smul.addr %s183, 32
      %s185 = smul.addr %s184, 4
      %s186 = scalar_lea.vmem %s0, %s185
      %p187 = pneg %p48
      %p188 = pneg %p45
      %p189 = pneg %p69
      %p190 = pneg %p66
      %p191 = pneg %p90
      %p192 = pneg %p87
      %p193 = pneg %p111
      %p194 = pneg %p108
      %p195 = pneg %p139
      %p196 = pneg %p136
      %s197 = smul.u32 32, %s20
      %p198 = scmp.lt.s32.totalorder %s19, 1
      %s199 = scalar_select %p198, %s19, 1
      %p200 = scmp.lt.s32.totalorder %s197, 31
      %s201 = scalar_select %p200, %s197, 31
      %s202 = smul.addr %s199, 32
      %s203 = sadd.s32 %s201, %s202
      %s204 = smul.addr %s203, 8
      %s205 = scalar_lea.vmem %s4, %s204
      %p206 = scmp.lt.s32.totalorder %s19, 1
      %s207 = scalar_select %p206, %s19, 1
      %s208 = smul.addr %s207, 32
      %s209 = smul.addr %s208, 4
      %s210 = scalar_lea.vmem %s0, %s209
      %s211 = smul.u32 32, %s20
      %p212 = scmp.lt.s32.totalorder %s19, 1
      %s213 = scalar_select %p212, %s19, 1
      %p214 = scmp.lt.s32.totalorder %s211, 31
      %s215 = scalar_select %p214, %s211, 31
      %s216 = smul.addr %s213, 32
      %s217 = sadd.s32 %s215, %s216
      %s218 = smul.addr %s217, 8
      %s219 = scalar_lea.vmem %s4, %s218
      %s220 = smul.u32 32, %s20
      %s222 = smul.u32 %s20, 16
      %s223 = smul.u32 %s222, 2
      %s224 = smul.addr %s223, 4
      %s225 = scalar_lea.vmem %s210, %s224
      %v226 = vld [vmem:[%s225] sm:$0xf]
      %v227 = vld [vmem:[%s225 + $0x4] sm:$0xf]
      %v228 = vld [vmem:[%s225 + $0x8] sm:$0xf]
      %v229 = vld [vmem:[%s225 + $0xc] sm:$0xf]
      %v230 = vld [vmem:[%s225 + $0x10] sm:$0xf]
      %v231 = vld [vmem:[%s225 + $0x14] sm:$0xf]
      %v232 = vld [vmem:[%s225 + $0x18] sm:$0xf]
      %v233 = vld [vmem:[%s225 + $0x1c] sm:$0xf]
      %v234 = vld [vmem:[%s225 + $0x20] sm:$0xf]
      %v235 = vld [vmem:[%s225 + $0x24] sm:$0xf]
      %v236 = vld [vmem:[%s225 + $0x28] sm:$0xf]
      %v237 = vld [vmem:[%s225 + $0x2c] sm:$0xf]
      %v238 = vld [vmem:[%s225 + $0x30] sm:$0xf]
      %v239 = vld [vmem:[%s225 + $0x34] sm:$0xf]
      %v240 = vld [vmem:[%s225 + $0x38] sm:$0xf]
      %v241 = vld [vmem:[%s225 + $0x3c] sm:$0xf]
      %v242 = vld [vmem:[%s225 + $0x40] sm:$0xf]
      %v243 = vld [vmem:[%s225 + $0x44] sm:$0xf]
      %v244 = vld [vmem:[%s225 + $0x48] sm:$0xf]
      %v245 = vld [vmem:[%s225 + $0x4c] sm:$0xf]
      %v246 = vld [vmem:[%s225 + $0x50] sm:$0xf]
      %v247 = vld [vmem:[%s225 + $0x54] sm:$0xf]
      %v248 = vld [vmem:[%s225 + $0x58] sm:$0xf]
      %v249 = vld [vmem:[%s225 + $0x5c] sm:$0xf]
      %v250 = vld [vmem:[%s225 + $0x60] sm:$0xf]
      %v251 = vld [vmem:[%s225 + $0x64] sm:$0xf]
      %v252 = vld [vmem:[%s225 + $0x68] sm:$0xf]
      %v253 = vld [vmem:[%s225 + $0x6c] sm:$0xf]
      %v254 = vld [vmem:[%s225 + $0x70] sm:$0xf]
      %v255 = vld [vmem:[%s225 + $0x74] sm:$0xf]
      %v256 = vld [vmem:[%s225 + $0x78] sm:$0xf]
      %v257 = vld [vmem:[%s225 + $0x7c] sm:$0xf]
      %v258 = vld [vmem:[%s1] sm:$0xf]
      %v291 = vunpack.c.l.b16 %v226
      %v292 = vunpack.c.l.b16 %v227
      %v293 = vunpack.c.l.b16 %v228
      %v294 = vunpack.c.l.b16 %v229
      %v295 = vunpack.c.l.b16 %v230
      %v296 = vunpack.c.l.b16 %v231
      %v297 = vunpack.c.l.b16 %v232
      %v298 = vunpack.c.l.b16 %v233
      %v299 = vunpack.c.l.b16 %v234
      %v300 = vunpack.c.l.b16 %v235
      %v301 = vunpack.c.l.b16 %v236
      %v302 = vunpack.c.l.b16 %v237
      %v303 = vunpack.c.l.b16 %v238
      %v304 = vunpack.c.l.b16 %v239
      %v305 = vunpack.c.l.b16 %v240
      %v306 = vunpack.c.l.b16 %v241
      %v307 = vunpack.c.l.b16 %v242
      %v308 = vunpack.c.l.b16 %v243
      %v309 = vunpack.c.l.b16 %v244
      %v310 = vunpack.c.l.b16 %v245
      %v311 = vunpack.c.l.b16 %v246
      %v312 = vunpack.c.l.b16 %v247
      %v313 = vunpack.c.l.b16 %v248
      %v314 = vunpack.c.l.b16 %v249
      %v315 = vunpack.c.l.b16 %v250
      %v316 = vunpack.c.l.b16 %v251
      %v317 = vunpack.c.l.b16 %v252
      %v318 = vunpack.c.l.b16 %v253
      %v319 = vunpack.c.l.b16 %v254
      %v320 = vunpack.c.l.b16 %v255
      %v321 = vunpack.c.l.b16 %v256
      %v322 = vunpack.c.l.b16 %v257
      %v323 = vpack.c.b16 %v292, %v291
      %v324 = vpack.c.b16 %v294, %v293
      %v325 = vpack.c.b16 %v296, %v295
      %v326 = vpack.c.b16 %v298, %v297
      %v327 = vpack.c.b16 %v300, %v299
      %v328 = vpack.c.b16 %v302, %v301
      %v329 = vpack.c.b16 %v304, %v303
      %v330 = vpack.c.b16 %v306, %v305
      %v331 = vpack.c.b16 %v308, %v307
      %v332 = vpack.c.b16 %v310, %v309
      %v333 = vpack.c.b16 %v312, %v311
      %v334 = vpack.c.b16 %v314, %v313
      %v335 = vpack.c.b16 %v316, %v315
      %v336 = vpack.c.b16 %v318, %v317
      %v337 = vpack.c.b16 %v320, %v319
      %v338 = vpack.c.b16 %v322, %v321
      %vm339 = vcmask 64512
      %v341 = vsel %vm339, %v323, 0
      %v344 = vsel %vm339, %v324, 0
      %v347 = vsel %vm339, %v325, 0
      %v350 = vsel %vm339, %v326, 0
      %v353 = vsel %vm339, %v327, 0
      %v356 = vsel %vm339, %v328, 0
      %v359 = vsel %vm339, %v329, 0
      %v362 = vsel %vm339, %v330, 0
      %v365 = vsel %vm339, %v331, 0
      %v368 = vsel %vm339, %v332, 0
      %v371 = vsel %vm339, %v333, 0
      %v374 = vsel %vm339, %v334, 0
      %v377 = vsel %vm339, %v335, 0
      %v380 = vsel %vm339, %v336, 0
      %v383 = vsel %vm339, %v337, 0
      %v386 = vsel %vm339, %v338, 0
      %vm388 = vcmask 1043456
      %v390 = vsel %vm388, %v258, 0
      %392 = vmatprep.subr.bf16.mxu0 0
      %393 = vmatpush1.bf16.msra.mxu0 %v390
      %394 = vmatprep.subr.bf16.mxu0 0
      %395 = vmatpush1.bf16.msra.mxu0 0
      %396 = vmatprep.subr.bf16.mxu0 0
      %397 = vmatpush1.bf16.msra.mxu0 0
      %398 = vmatprep.subr.bf16.mxu0 0
      %399 = vmatpush1.bf16.msra.mxu0 0
      %400 = vmatprep.subr.bf16.mxu0 0
      %401 = vmatpush1.bf16.msra.mxu0 0
      %402 = vmatprep.subr.bf16.mxu0 0
      %403 = vmatpush1.bf16.msra.mxu0 0
      %404 = vmatprep.subr.bf16.mxu0 0
      %405 = vmatpush1.bf16.msra.mxu0 0
      %406 = vmatprep.subr.bf16.mxu0 0
      %407 = vmatpush1.bf16.msra.mxu0 0
      %408 = vmatprep.subr.bf16.mxu0 0
      %409 = vmatpush1.bf16.msra.mxu0 0
      %410 = vmatprep.subr.bf16.mxu0 0
      %411 = vmatpush1.bf16.msra.mxu0 0
      %412 = vmatprep.subr.bf16.mxu0 0
      %413 = vmatpush1.bf16.msra.mxu0 0
      %414 = vmatprep.subr.bf16.mxu0 0
      %415 = vmatpush1.bf16.msra.mxu0 0
      %416 = vmatprep.subr.bf16.mxu0 0
      %417 = vmatpush1.bf16.msra.mxu0 0
      %418 = vmatprep.subr.bf16.mxu0 0
      %419 = vmatpush1.bf16.msra.mxu0 0
      %420 = vmatprep.subr.bf16.mxu0 0
      %421 = vmatpush1.bf16.msra.mxu0 0
      %422 = vmatprep.subr.bf16.mxu0 0
      %423 = vmatpush1.bf16.msra.mxu0 0
      %424 = vmatprep.mubr.bf16.mxu0 0
      %425 = vmatmul.mubr.bf16.gmra.mrb[0].mxu0 %v341
      %v426 = vpop.f32.mrb[0].mxu0
      %v427 = vadd.f32 0.0, %v426
      %v428 = vpop.f32.mrb[0].mxu0
      %v429 = vpop.f32.mrb[0].mxu0
      %v430 = vadd.f32 0.0, %v429
      %v431 = vpop.f32.mrb[0].mxu0
      %432 = vmatprep.mubr.bf16.mxu0 0
      %433 = vmatmul.mubr.bf16.gmra.mrb[0].mxu0 %v344
      %v434 = vpop.f32.mrb[0].mxu0
      %v435 = vadd.f32 0.0, %v434
      %v436 = vpop.f32.mrb[0].mxu0
      %v437 = vpop.f32.mrb[0].mxu0
      %v438 = vadd.f32 0.0, %v437
      %v439 = vpop.f32.mrb[0].mxu0
      %440 = vmatprep.mubr.bf16.mxu0 0
      %441 = vmatmul.mubr.bf16.gmra.mrb[0].mxu0 %v347
      %v442 = vpop.f32.mrb[0].mxu0
      %v443 = vadd.f32 0.0, %v442
      %v444 = vpop.f32.mrb[0].mxu0
      %v445 = vpop.f32.mrb[0].mxu0
      %v446 = vadd.f32 0.0, %v445
      %v447 = vpop.f32.mrb[0].mxu0
      %448 = vmatprep.mubr.bf16.mxu0 0
      %449 = vmatmul.mubr.bf16.gmra.mrb[0].mxu0 %v350
      %v450 = vpop.f32.mrb[0].mxu0
      %v451 = vadd.f32 0.0, %v450
      %v452 = vpop.f32.mrb[0].mxu0
      %v453 = vpop.f32.mrb[0].mxu0
      %v454 = vadd.f32 0.0, %v453
      %v455 = vpop.f32.mrb[0].mxu0
      %456 = vmatprep.mubr.bf16.mxu0 0
      %457 = vmatmul.mubr.bf16.gmra.mrb[0].mxu0 %v353
      %v458 = vpop.f32.mrb[0].mxu0
      %v459 = vadd.f32 0.0, %v458
      %v460 = vpop.f32.mrb[0].mxu0
      %v461 = vpop.f32.mrb[0].mxu0
      %v462 = vadd.f32 0.0, %v461
      %v463 = vpop.f32.mrb[0].mxu0
      %464 = vmatprep.mubr.bf16.mxu0 0
      %465 = vmatmul.mubr.bf16.gmra.mrb[0].mxu0 %v356
      %v466 = vpop.f32.mrb[0].mxu0
      %v467 = vadd.f32 0.0, %v466
      %v468 = vpop.f32.mrb[0].mxu0
      %v469 = vpop.f32.mrb[0].mxu0
      %v470 = vadd.f32 0.0, %v469
      %v471 = vpop.f32.mrb[0].mxu0
      %472 = vmatprep.mubr.bf16.mxu0 0
      %473 = vmatmul.mubr.bf16.gmra.mrb[0].mxu0 %v359
      %v474 = vpop.f32.mrb[0].mxu0
      %v475 = vadd.f32 0.0, %v474
      %v476 = vpop.f32.mrb[0].mxu0
      %v477 = vpop.f32.mrb[0].mxu0
      %v478 = vadd.f32 0.0, %v477
      %v479 = vpop.f32.mrb[0].mxu0
      %480 = vmatprep.mubr.bf16.mxu0 0
      %481 = vmatmul.mubr.bf16.gmra.mrb[0].mxu0 %v362
      %v482 = vpop.f32.mrb[0].mxu0
      %v483 = vadd.f32 0.0, %v482
      %v484 = vpop.f32.mrb[0].mxu0
      %v485 = vpop.f32.mrb[0].mxu0
      %v486 = vadd.f32 0.0, %v485
      %v487 = vpop.f32.mrb[0].mxu0
      %488 = vmatprep.mubr.bf16.mxu0 0
      %489 = vmatmul.mubr.bf16.gmra.mrb[0].mxu0 %v365
      %v490 = vpop.f32.mrb[0].mxu0
      %v491 = vadd.f32 0.0, %v490
      %v492 = vpop.f32.mrb[0].mxu0
      %v493 = vpop.f32.mrb[0].mxu0
      %v494 = vadd.f32 0.0, %v493
      %v495 = vpop.f32.mrb[0].mxu0
      %496 = vmatprep.mubr.bf16.mxu0 0
      %497 = vmatmul.mubr.bf16.gmra.mrb[0].mxu0 %v368
      %v498 = vpop.f32.mrb[0].mxu0
      %v499 = vadd.f32 0.0, %v498
      %v500 = vpop.f32.mrb[0].mxu0
      %v501 = vpop.f32.mrb[0].mxu0
      %v502 = vadd.f32 0.0, %v501
      %v503 = vpop.f32.mrb[0].mxu0
      %504 = vmatprep.mubr.bf16.mxu0 0
      %505 = vmatmul.mubr.bf16.gmra.mrb[0].mxu0 %v371
      %v506 = vpop.f32.mrb[0].mxu0
      %v507 = vadd.f32 0.0, %v506
      %v508 = vpop.f32.mrb[0].mxu0
      %v509 = vpop.f32.mrb[0].mxu0
      %v510 = vadd.f32 0.0, %v509
      %v511 = vpop.f32.mrb[0].mxu0
      %512 = vmatprep.mubr.bf16.mxu0 0
      %513 = vmatmul.mubr.bf16.gmra.mrb[0].mxu0 %v374
      %v514 = vpop.f32.mrb[0].mxu0
      %v515 = vadd.f32 0.0, %v514
      %v516 = vpop.f32.mrb[0].mxu0
      %v517 = vpop.f32.mrb[0].mxu0
      %v518 = vadd.f32 0.0, %v517
      %v519 = vpop.f32.mrb[0].mxu0
      %520 = vmatprep.mubr.bf16.mxu0 0
      %521 = vmatmul.mubr.bf16.gmra.mrb[0].mxu0 %v377
      %v522 = vpop.f32.mrb[0].mxu0
      %v523 = vadd.f32 0.0, %v522
      %v524 = vpop.f32.mrb[0].mxu0
      %v525 = vpop.f32.mrb[0].mxu0
      %v526 = vadd.f32 0.0, %v525
      %v527 = vpop.f32.mrb[0].mxu0
      %528 = vmatprep.mubr.bf16.mxu0 0
      %529 = vmatmul.mubr.bf16.gmra.mrb[0].mxu0 %v380
      %v530 = vpop.f32.mrb[0].mxu0
      %v531 = vadd.f32 0.0, %v530
      %v532 = vpop.f32.mrb[0].mxu0
      %v533 = vpop.f32.mrb[0].mxu0
      %v534 = vadd.f32 0.0, %v533
      %v535 = vpop.f32.mrb[0].mxu0
      %536 = vmatprep.mubr.bf16.mxu0 0
      %537 = vmatmul.mubr.bf16.gmra.mrb[0].mxu0 %v383
      %v538 = vpop.f32.mrb[0].mxu0
      %v539 = vadd.f32 0.0, %v538
      %v540 = vpop.f32.mrb[0].mxu0
      %v541 = vpop.f32.mrb[0].mxu0
      %v542 = vadd.f32 0.0, %v541
      %v543 = vpop.f32.mrb[0].mxu0
      %544 = vmatprep.mubr.bf16.mxu0 0
      %545 = vmatmul.mubr.bf16.gmra.mrb[0].mxu0 %v386
      %v546 = vpop.f32.mrb[0].mxu0
      %v547 = vadd.f32 0.0, %v546
      %v548 = vpop.f32.mrb[0].mxu0
      %v549 = vpop.f32.mrb[0].mxu0
      %v550 = vadd.f32 0.0, %v549
      %v551 = vpop.f32.mrb[0].mxu0
      %552 = vdwg.mxu0
      %v553 = vld [vmem:[%s2] sm:$0x1]
      %v555 = vlaneseq
      %v556 = vshrl.u32 %v555, 7
      %v557 = vsub.s32 0, %v556
      %v558 = vrot.slane %v553, %v557
      %v560 = vmul.f32 %v427, %v558
      %v561 = vmul.f32 %v430, %v558
      %v562 = vmul.f32 %v435, %v558
      %v563 = vmul.f32 %v438, %v558
      %v564 = vmul.f32 %v443, %v558
      %v565 = vmul.f32 %v446, %v558
      %v566 = vmul.f32 %v451, %v558
      %v567 = vmul.f32 %v454, %v558
      %v568 = vmul.f32 %v459, %v558
      %v569 = vmul.f32 %v462, %v558
      %v570 = vmul.f32 %v467, %v558
      %v571 = vmul.f32 %v470, %v558
      %v572 = vmul.f32 %v475, %v558
      %v573 = vmul.f32 %v478, %v558
      %v574 = vmul.f32 %v483, %v558
      %v575 = vmul.f32 %v486, %v558
      %v576 = vmul.f32 %v491, %v558
      %v577 = vmul.f32 %v494, %v558
      %v578 = vmul.f32 %v499, %v558
      %v579 = vmul.f32 %v502, %v558
      %v580 = vmul.f32 %v507, %v558
      %v581 = vmul.f32 %v510, %v558
      %v582 = vmul.f32 %v515, %v558
      %v583 = vmul.f32 %v518, %v558
      %v584 = vmul.f32 %v523, %v558
      %v585 = vmul.f32 %v526, %v558
      %v586 = vmul.f32 %v531, %v558
      %v587 = vmul.f32 %v534, %v558
      %v588 = vmul.f32 %v539, %v558
      %v589 = vmul.f32 %v542, %v558
      %v590 = vmul.f32 %v547, %v558
      %v591 = vmul.f32 %v550, %v558
      %v592 = vld [vmem:[%s3] sm:$0x1]
      %v594 = vlaneseq
      %v595 = vshrl.u32 %v594, 7
      %v596 = vsub.s32 0, %v595
      %v597 = vrot.slane %v592, %v596
      %v599 = vadd.f32 %v560, %v597
      %v600 = vadd.f32 %v561, %v597
      %v601 = vadd.f32 %v562, %v597
      %v602 = vadd.f32 %v563, %v597
      %v603 = vadd.f32 %v564, %v597
      %v604 = vadd.f32 %v565, %v597
      %v605 = vadd.f32 %v566, %v597
      %v606 = vadd.f32 %v567, %v597
      %v607 = vadd.f32 %v568, %v597
      %v608 = vadd.f32 %v569, %v597
      %v609 = vadd.f32 %v570, %v597
      %v610 = vadd.f32 %v571, %v597
      %v611 = vadd.f32 %v572, %v597
      %v612 = vadd.f32 %v573, %v597
      %v613 = vadd.f32 %v574, %v597
      %v614 = vadd.f32 %v575, %v597
      %v615 = vadd.f32 %v576, %v597
      %v616 = vadd.f32 %v577, %v597
      %v617 = vadd.f32 %v578, %v597
      %v618 = vadd.f32 %v579, %v597
      %v619 = vadd.f32 %v580, %v597
      %v620 = vadd.f32 %v581, %v597
      %v621 = vadd.f32 %v582, %v597
      %v622 = vadd.f32 %v583, %v597
      %v623 = vadd.f32 %v584, %v597
      %v624 = vadd.f32 %v585, %v597
      %v625 = vadd.f32 %v586, %v597
      %v626 = vadd.f32 %v587, %v597
      %v627 = vadd.f32 %v588, %v597
      %v628 = vadd.f32 %v589, %v597
      %v629 = vadd.f32 %v590, %v597
      %v630 = vadd.f32 %v591, %v597
      %v631 = vxor.u32 %v599, 2147483648
      %v632 = vxor.u32 %v600, 2147483648
      %v633 = vxor.u32 %v601, 2147483648
      %v634 = vxor.u32 %v602, 2147483648
      %v635 = vxor.u32 %v603, 2147483648
      %v636 = vxor.u32 %v604, 2147483648
      %v637 = vxor.u32 %v605, 2147483648
      %v638 = vxor.u32 %v606, 2147483648
      %v639 = vxor.u32 %v607, 2147483648
      %v640 = vxor.u32 %v608, 2147483648
      %v641 = vxor.u32 %v609, 2147483648
      %v642 = vxor.u32 %v610, 2147483648
      %v643 = vxor.u32 %v611, 2147483648
      %v644 = vxor.u32 %v612, 2147483648
      %v645 = vxor.u32 %v613, 2147483648
      %v646 = vxor.u32 %v614, 2147483648
      %v647 = vxor.u32 %v615, 2147483648
      %v648 = vxor.u32 %v616, 2147483648
      %v649 = vxor.u32 %v617, 2147483648
      %v650 = vxor.u32 %v618, 2147483648
      %v651 = vxor.u32 %v619, 2147483648
      %v652 = vxor.u32 %v620, 2147483648
      %v653 = vxor.u32 %v621, 2147483648
      %v654 = vxor.u32 %v622, 2147483648
      %v655 = vxor.u32 %v623, 2147483648
      %v656 = vxor.u32 %v624, 2147483648
      %v657 = vxor.u32 %v625, 2147483648
      %v658 = vxor.u32 %v626, 2147483648
      %v659 = vxor.u32 %v627, 2147483648
      %v660 = vxor.u32 %v628, 2147483648
      %v661 = vxor.u32 %v629, 2147483648
      %v662 = vxor.u32 %v630, 2147483648
      %v663 = vmul.f32 %v631, 1.442695
      %v664 = vpow.pop %v663
      %v665 = vmul.f32 %v632, 1.442695
      %v666 = vpow.pop %v665
      %v667 = vmul.f32 %v633, 1.442695
      %v668 = vpow.pop %v667
      %v669 = vmul.f32 %v634, 1.442695
      %v670 = vpow.pop %v669
      %v671 = vmul.f32 %v635, 1.442695
      %v672 = vpow.pop %v671
      %v673 = vmul.f32 %v636, 1.442695
      %v674 = vpow.pop %v673
      %v675 = vmul.f32 %v637, 1.442695
      %v676 = vpow.pop %v675
      %v677 = vmul.f32 %v638, 1.442695
      %v678 = vpow.pop %v677
      %v679 = vmul.f32 %v639, 1.442695
      %v680 = vpow.pop %v679
      %v681 = vmul.f32 %v640, 1.442695
      %v682 = vpow.pop %v681
      %v683 = vmul.f32 %v641, 1.442695
      %v684 = vpow.pop %v683
      %v685 = vmul.f32 %v642, 1.442695
      %v686 = vpow.pop %v685
      %v687 = vmul.f32 %v643, 1.442695
      %v688 = vpow.pop %v687
      %v689 = vmul.f32 %v644, 1.442695
      %v690 = vpow.pop %v689
      %v691 = vmul.f32 %v645, 1.442695
      %v692 = vpow.pop %v691
      %v693 = vmul.f32 %v646, 1.442695
      %v694 = vpow.pop %v693
      %v695 = vmul.f32 %v647, 1.442695
      %v696 = vpow.pop %v695
      %v697 = vmul.f32 %v648, 1.442695
      %v698 = vpow.pop %v697
      %v699 = vmul.f32 %v649, 1.442695
      %v700 = vpow.pop %v699
      %v701 = vmul.f32 %v650, 1.442695
      %v702 = vpow.pop %v701
      %v703 = vmul.f32 %v651, 1.442695
      %v704 = vpow.pop %v703
      %v705 = vmul.f32 %v652, 1.442695
      %v706 = vpow.pop %v705
      %v707 = vmul.f32 %v653, 1.442695
      %v708 = vpow.pop %v707
      %v709 = vmul.f32 %v654, 1.442695
      %v710 = vpow.pop %v709
      %v711 = vmul.f32 %v655, 1.442695
      %v712 = vpow.pop %v711
      %v713 = vmul.f32 %v656, 1.442695
      %v714 = vpow.pop %v713
      %v715 = vmul.f32 %v657, 1.442695
      %v716 = vpow.pop %v715
      %v717 = vmul.f32 %v658, 1.442695
      %v718 = vpow.pop %v717
      %v719 = vmul.f32 %v659, 1.442695
      %v720 = vpow.pop %v719
      %v721 = vmul.f32 %v660, 1.442695
      %v722 = vpow.pop %v721
      %v723 = vmul.f32 %v661, 1.442695
      %v724 = vpow.pop %v723
      %v725 = vmul.f32 %v662, 1.442695
      %v726 = vpow.pop %v725
      %v727 = vadd.f32 %v664, 1.0
      %v728 = vadd.f32 %v666, 1.0
      %v729 = vadd.f32 %v668, 1.0
      %v730 = vadd.f32 %v670, 1.0
      %v731 = vadd.f32 %v672, 1.0
      %v732 = vadd.f32 %v674, 1.0
      %v733 = vadd.f32 %v676, 1.0
      %v734 = vadd.f32 %v678, 1.0
      %v735 = vadd.f32 %v680, 1.0
      %v736 = vadd.f32 %v682, 1.0
      %v737 = vadd.f32 %v684, 1.0
      %v738 = vadd.f32 %v686, 1.0
      %v739 = vadd.f32 %v688, 1.0
      %v740 = vadd.f32 %v690, 1.0
      %v741 = vadd.f32 %v692, 1.0
      %v742 = vadd.f32 %v694, 1.0
      %v743 = vadd.f32 %v696, 1.0
      %v744 = vadd.f32 %v698, 1.0
      %v745 = vadd.f32 %v700, 1.0
      %v746 = vadd.f32 %v702, 1.0
      %v747 = vadd.f32 %v704, 1.0
      %v748 = vadd.f32 %v706, 1.0
      %v749 = vadd.f32 %v708, 1.0
      %v750 = vadd.f32 %v710, 1.0
      %v751 = vadd.f32 %v712, 1.0
      %v752 = vadd.f32 %v714, 1.0
      %v753 = vadd.f32 %v716, 1.0
      %v754 = vadd.f32 %v718, 1.0
      %v755 = vadd.f32 %v720, 1.0
      %v756 = vadd.f32 %v722, 1.0
      %v757 = vadd.f32 %v724, 1.0
      %v758 = vadd.f32 %v726, 1.0
      %v759 = vrcp.pop %v727
      %v760 = vmul.f32 1.0, %v759
      %v761 = vrcp.pop %v728
      %v762 = vmul.f32 1.0, %v761
      %v763 = vrcp.pop %v729
      %v764 = vmul.f32 1.0, %v763
      %v765 = vrcp.pop %v730
      %v766 = vmul.f32 1.0, %v765
      %v767 = vrcp.pop %v731
      %v768 = vmul.f32 1.0, %v767
      %v769 = vrcp.pop %v732
      %v770 = vmul.f32 1.0, %v769
      %v771 = vrcp.pop %v733
      %v772 = vmul.f32 1.0, %v771
      %v773 = vrcp.pop %v734
      %v774 = vmul.f32 1.0, %v773
      %v775 = vrcp.pop %v735
      %v776 = vmul.f32 1.0, %v775
      %v777 = vrcp.pop %v736
      %v778 = vmul.f32 1.0, %v777
      %v779 = vrcp.pop %v737
      %v780 = vmul.f32 1.0, %v779
      %v781 = vrcp.pop %v738
      %v782 = vmul.f32 1.0, %v781
      %v783 = vrcp.pop %v739
      %v784 = vmul.f32 1.0, %v783
      %v785 = vrcp.pop %v740
      %v786 = vmul.f32 1.0, %v785
      %v787 = vrcp.pop %v741
      %v788 = vmul.f32 1.0, %v787
      %v789 = vrcp.pop %v742
      %v790 = vmul.f32 1.0, %v789
      %v791 = vrcp.pop %v743
      %v792 = vmul.f32 1.0, %v791
      %v793 = vrcp.pop %v744
      %v794 = vmul.f32 1.0, %v793
      %v795 = vrcp.pop %v745
      %v796 = vmul.f32 1.0, %v795
      %v797 = vrcp.pop %v746
      %v798 = vmul.f32 1.0, %v797
      %v799 = vrcp.pop %v747
      %v800 = vmul.f32 1.0, %v799
      %v801 = vrcp.pop %v748
      %v802 = vmul.f32 1.0, %v801
      %v803 = vrcp.pop %v749
      %v804 = vmul.f32 1.0, %v803
      %v805 = vrcp.pop %v750
      %v806 = vmul.f32 1.0, %v805
      %v807 = vrcp.pop %v751
      %v808 = vmul.f32 1.0, %v807
      %v809 = vrcp.pop %v752
      %v810 = vmul.f32 1.0, %v809
      %v811 = vrcp.pop %v753
      %v812 = vmul.f32 1.0, %v811
      %v813 = vrcp.pop %v754
      %v814 = vmul.f32 1.0, %v813
      %v815 = vrcp.pop %v755
      %v816 = vmul.f32 1.0, %v815
      %v817 = vrcp.pop %v756
      %v818 = vmul.f32 1.0, %v817
      %v819 = vrcp.pop %v757
      %v820 = vmul.f32 1.0, %v819
      %v821 = vrcp.pop %v758
      %v822 = vmul.f32 1.0, %v821
      %v823 = vmul.f32 %v599, %v760
      %v824 = vmul.f32 %v600, %v762
      %v825 = vmul.f32 %v601, %v764
      %v826 = vmul.f32 %v602, %v766
      %v827 = vmul.f32 %v603, %v768
      %v828 = vmul.f32 %v604, %v770
      %v829 = vmul.f32 %v605, %v772
      %v830 = vmul.f32 %v606, %v774
      %v831 = vmul.f32 %v607, %v776
      %v832 = vmul.f32 %v608, %v778
      %v833 = vmul.f32 %v609, %v780
      %v834 = vmul.f32 %v610, %v782
      %v835 = vmul.f32 %v611, %v784
      %v836 = vmul.f32 %v612, %v786
      %v837 = vmul.f32 %v613, %v788
      %v838 = vmul.f32 %v614, %v790
      %v839 = vmul.f32 %v615, %v792
      %v840 = vmul.f32 %v616, %v794
      %v841 = vmul.f32 %v617, %v796
      %v842 = vmul.f32 %v618, %v798
      %v843 = vmul.f32 %v619, %v800
      %v844 = vmul.f32 %v620, %v802
      %v845 = vmul.f32 %v621, %v804
      %v846 = vmul.f32 %v622, %v806
      %v847 = vmul.f32 %v623, %v808
      %v848 = vmul.f32 %v624, %v810
      %v849 = vmul.f32 %v625, %v812
      %v850 = vmul.f32 %v626, %v814
      %v851 = vmul.f32 %v627, %v816
      %v852 = vmul.f32 %v628, %v818
      %v853 = vmul.f32 %v629, %v820
      %v854 = vmul.f32 %v630, %v822
      %855 = vst.msk [vmem:[%s219] sm:$0xff] %vm339, %v823
      %856 = vst.msk [vmem:[%s219 + $0x8] sm:$0xff] %vm339, %v824
      %857 = vst.msk [vmem:[%s219 + $0x10] sm:$0xff] %vm339, %v825
      %858 = vst.msk [vmem:[%s219 + $0x18] sm:$0xff] %vm339, %v826
      %859 = vst.msk [vmem:[%s219 + $0x20] sm:$0xff] %vm339, %v827
      %860 = vst.msk [vmem:[%s219 + $0x28] sm:$0xff] %vm339, %v828
      %861 = vst.msk [vmem:[%s219 + $0x30] sm:$0xff] %vm339, %v829
      %862 = vst.msk [vmem:[%s219 + $0x38] sm:$0xff] %vm339, %v830
      %863 = vst.msk [vmem:[%s219 + $0x40] sm:$0xff] %vm339, %v831
      %864 = vst.msk [vmem:[%s219 + $0x48] sm:$0xff] %vm339, %v832
      %865 = vst.msk [vmem:[%s219 + $0x50] sm:$0xff] %vm339, %v833
      %866 = vst.msk [vmem:[%s219 + $0x58] sm:$0xff] %vm339, %v834
      %867 = vst.msk [vmem:[%s219 + $0x60] sm:$0xff] %vm339, %v835
      %868 = vst.msk [vmem:[%s219 + $0x68] sm:$0xff] %vm339, %v836
      %869 = vst.msk [vmem:[%s219 + $0x70] sm:$0xff] %vm339, %v837
      %870 = vst.msk [vmem:[%s219 + $0x78] sm:$0xff] %vm339, %v838
      %871 = vst.msk [vmem:[%s219 + $0x80] sm:$0xff] %vm339, %v839
      %872 = vst.msk [vmem:[%s219 + $0x88] sm:$0xff] %vm339, %v840
      %873 = vst.msk [vmem:[%s219 + $0x90] sm:$0xff] %vm339, %v841
      %874 = vst.msk [vmem:[%s219 + $0x98] sm:$0xff] %vm339, %v842
      %875 = vst.msk [vmem:[%s219 + $0xa0] sm:$0xff] %vm339, %v843
      %876 = vst.msk [vmem:[%s219 + $0xa8] sm:$0xff] %vm339, %v844
      %877 = vst.msk [vmem:[%s219 + $0xb0] sm:$0xff] %vm339, %v845
      %878 = vst.msk [vmem:[%s219 + $0xb8] sm:$0xff] %vm339, %v846
      %879 = vst.msk [vmem:[%s219 + $0xc0] sm:$0xff] %vm339, %v847
      %880 = vst.msk [vmem:[%s219 + $0xc8] sm:$0xff] %vm339, %v848
      %881 = vst.msk [vmem:[%s219 + $0xd0] sm:$0xff] %vm339, %v849
      %882 = vst.msk [vmem:[%s219 + $0xd8] sm:$0xff] %vm339, %v850
      %883 = vst.msk [vmem:[%s219 + $0xe0] sm:$0xff] %vm339, %v851
      %884 = vst.msk [vmem:[%s219 + $0xe8] sm:$0xff] %vm339, %v852
      %885 = vst.msk [vmem:[%s219 + $0xf0] sm:$0xff] %vm339, %v853
      %886 = vst.msk [vmem:[%s219 + $0xf8] sm:$0xff] %vm339, %v854
      %s887 = smul.u32 32, %s20
      %p888 = scmp.lt.s32.totalorder %s19, 1
      %s889 = scalar_select %p888, %s19, 1
      %p890 = scmp.lt.s32.totalorder %s887, 31
      %s891 = scalar_select %p890, %s887, 31
      %s892 = smul.addr %s889, 32
      %s893 = sadd.s32 %s891, %s892
      %s894 = smul.addr %s893, 8
      %s895 = scalar_lea.vmem %s4, %s894
      // Predicated region
      $region37: #{tpu_custom_call.1} parent=35 // pred_check
        %p896 = pneg %p136
      $region38: #{tpu_custom_call.1} parent=35 // pred_check_branch
        %898 = sbr.rel (%p896) target = $region40
      $region39: #{tpu_custom_call.1} parent=35 // pred_region
        %s899 = smul.u32 32, %s20
      $region40: #{tpu_custom_call.1} parent=35 // pred_fallthru
        _
    $region36: #{tpu_custom_call.1} parent=5 // pred_fallthru
      _
    %p900 = scmp.le.s32.totalorder 2, %s10
    // Predicated region
    $region41: #{tpu_custom_call.1} parent=5 // pred_check
      %p901 = pneg %p900
    $region42: #{tpu_custom_call.1} parent=5 // pred_check_branch
      %903 = sbr.rel (%p901) target = $region44
    $region43: #{tpu_custom_call.1} parent=5 // pred_region
      %s904 = ssub.s32 %s10, 2
      // Predicated region
      $region45: #{tpu_custom_call.1} parent=43 // pred_check
        %p905 = pneg %p142
      $region46: #{tpu_custom_call.1} parent=43 // pred_check_branch
        %907 = sbr.rel (%p905) target = $region48
      $region47: #{tpu_custom_call.1} parent=43 // pred_region
        %s908 = smul.u32 32, %s22
        %p909 = scmp.lt.s32.totalorder %s21, 1
        %s910 = scalar_select %p909, %s21, 1
        %p911 = scmp.lt.s32.totalorder %s908, 31
        %s912 = scalar_select %p911, %s908, 31
        %s913 = smul.addr %s910, 32
        %s914 = sadd.s32 %s912, %s913
        %s915 = smul.addr %s914, 8
        %s916 = scalar_lea.vmem %s4, %s915
      $region48: #{tpu_custom_call.1} parent=43 // pred_fallthru
        _
    $region44: #{tpu_custom_call.1} parent=5 // pred_fallthru
      _
  $region6: #{tpu_custom_call.1} parent=0 // loop_footer
    %s14 = sadd.s32 1, %s10
  $region7: #{tpu_custom_call.1} parent=0 // loop_footer_branch
    %9 = sbr.rel target = $region3
  $region8: #{tpu_custom_call.1} parent=0 // loop_exit
    _

</llo_original>
